<compile_context>
chip_gen: v7x
topology: tpu7x:2x2x1
jax: 0.10.0
libtpu: 0.0.40
codegen_flags: <defaults>
</compile_context>

<pallas_src>
import functools

import jax
import jax.numpy as jnp
from jax.experimental import pallas as pl
from jax.experimental.pallas import tpu as pltpu

KSIZE = 5
PAD = KSIZE // 2


def variance_kernel(xp_ref, var_ref, xmean_ref):
    # xp_ref:   (1, C, H+2*PAD, W+2*PAD) reflect-padded block.
    # var_ref:  (1, H, W) channel-mean local variance.
    # xmean_ref:(1, H, W) channel-mean of x.
    H = var_ref.shape[1]
    W = var_ref.shape[2]
    C = xp_ref.shape[1]
    inv_k2 = jnp.float32(1.0 / (KSIZE * KSIZE))

    var_acc = None
    xm_acc = None
    # Running per-channel accumulation: box-filter channel c, add, discard.
    for c in range(C):
        xc = xp_ref[0, c]                       # (Hp, Wp)
        xc2 = xc * xc

        # Separable 5x5 box sum: H (sublane) direction first ...
        rs = xc[0:H, :]
        rs2 = xc2[0:H, :]
        for di in range(1, KSIZE):
            rs = rs + xc[di:di + H, :]
            rs2 = rs2 + xc2[di:di + H, :]
        # ... then W (lane) direction.
        s = rs[:, 0:W]
        s2 = rs2[:, 0:W]
        for dj in range(1, KSIZE):
            s = s + rs[:, dj:dj + W]
            s2 = s2 + rs2[:, dj:dj + W]

        lm = s * inv_k2
        var_c = s2 * inv_k2 - lm * lm           # (H, W)
        xcen = xc[PAD:PAD + H, PAD:PAD + W]     # un-padded centre == x[:, c]

        if c == 0:
            var_acc = var_c
            xm_acc = xcen
        else:
            var_acc = var_acc + var_c
            xm_acc = xm_acc + xcen

    inv_c = jnp.float32(1.0 / C)
    var_ref[0] = var_acc * inv_c
    xmean_ref[0] = xm_acc * inv_c


def spikes_kernel(vmin_ref, invr_ref, var_ref, xmean_ref, prob_ref, out_ref,
                  *, time_window, fire_window):
    # var_ref/xmean_ref: (1, H, W); prob_ref/out_ref: (1, H, W*T) lane-dense.
    T = time_window
    H = var_ref.shape[1]
    W = var_ref.shape[2]
    WT = out_ref.shape[2]                        # == W * T (128 lanes here)

    var = var_ref[0]                             # (H, W)
    xm = xmean_ref[0]                            # (H, W)

    norm = (var - vmin_ref[0]) * invr_ref[0]     # mul by precomputed 1/range
    c0 = jnp.float32(1.0 / (time_window - fire_window))
    lat = 1.0 / (norm + c0)                      # 'log' mode latency, (H, W)

    # Lane layout of the output: lane l = w*T + t.
    lane = jax.lax.broadcasted_iota(jnp.int32, (H, WT), 1)
    group = lane // T                            # -> pixel column w per lane
    tf = (lane - group * T).astype(jnp.float32)  # -> time index t per lane

    # Exact select-based expansion of (H, W) -> (H, W*T): out[:, w*T+t] = a[:, w].
    lat_e = jnp.zeros((H, WT), jnp.float32)
    xm_e = jnp.zeros((H, WT), jnp.float32)
    for w in range(W):
        sel = group == w
        lat_e = jnp.where(sel, lat[:, w:w + 1], lat_e)
        xm_e = jnp.where(sel, xm[:, w:w + 1], xm_e)

    firing = jnp.logical_and(tf >= lat_e,
                             tf < lat_e + jnp.float32(fire_window))
    prob = prob_ref[0]                           # (H, WT)
    out_ref[0] = jnp.where(jnp.logical_and(prob < xm_e, firing),
                           jnp.float32(1.0), jnp.float32(0.0))


def rl_encoder(x, key, time_window, fire_window_ratio):
    fire_window = int(time_window * fire_window_ratio)
    B, C, H, W = x.shape
    Hp, Wp = H + 2 * PAD, W + 2 * PAD
    WT = W * time_window                         # 128 -> unmasked full-lane stores

    # F.pad(..., mode='reflect') equivalent (tiny vs the (B,H,W,T) tensors).
    xp = jnp.pad(x, ((0, 0), (0, 0), (PAD, PAD), (PAD, PAD)), mode="reflect")

    var_map, x_mean = pl.pallas_call(
        variance_kernel,
        out_shape=(jax.ShapeDtypeStruct((B, H, W), jnp.float32),
                   jax.ShapeDtypeStruct((B, H, W), jnp.float32)),
        grid=(B,),
        in_specs=[pl.BlockSpec((1, C, Hp, Wp), lambda b: (b, 0, 0, 0))],
        out_specs=[pl.BlockSpec((1, H, W), lambda b: (b, 0, 0)),
                   pl.BlockSpec((1, H, W), lambda b: (b, 0, 0))],
        compiler_params=pltpu.CompilerParams(dimension_semantics=("parallel",)),
    )(xp)

    # Global min / max over the variance map (2 KB here; at scale emit partial
    # per-batch min/max from variance_kernel to skip this HBM read pass).
    vmin = jnp.min(var_map)
    vmax = jnp.max(var_map)
    inv_range = (jnp.float32(1.0) / (vmax - vmin)).reshape(1)
    vmin = vmin.reshape(1)

    # torch.rand equivalent, generated once by XLA's RNG and streamed in.
    spike_prob = jax.random.uniform(key, (B, H, W, time_window), jnp.float32)
    prob_flat = spike_prob.reshape(B, H, WT)     # free contiguous view

    kernel = functools.partial(spikes_kernel,
                               time_window=time_window,
                               fire_window=fire_window)
    spikes_flat = pl.pallas_call(
        kernel,
        out_shape=jax.ShapeDtypeStruct((B, H, WT), jnp.float32),
        grid=(B,),
        in_specs=[
            pl.BlockSpec(memory_space=pltpu.MemorySpace.SMEM),   # vmin (1,)
            pl.BlockSpec(memory_space=pltpu.MemorySpace.SMEM),   # 1/(vmax-vmin)
            pl.BlockSpec((1, H, W), lambda b: (b, 0, 0)),        # var map
            pl.BlockSpec((1, H, W), lambda b: (b, 0, 0)),        # channel mean
            pl.BlockSpec((1, H, WT), lambda b: (b, 0, 0)),       # spike prob
        ],
        out_specs=pl.BlockSpec((1, H, WT), lambda b: (b, 0, 0)),
        compiler_params=pltpu.CompilerParams(dimension_semantics=("parallel",)),
    )(vmin, inv_range, var_map, x_mean, prob_flat)

    # (B, H, W*T) -> (B, H, W, T) is a contiguous no-copy view, not a transpose.
    spikes = spikes_flat.reshape(B, H, W, time_window)
    return spikes, spike_prob


def reference(x, spike_prob, time_window, fire_window):
    """Pure-JAX reference mirroring the PyTorch forward with the same op
    ordering as the kernels (bit-stable 0/1 spike comparison)."""
    B, C, H, W = x.shape
    xp = jnp.pad(x, ((0, 0), (0, 0), (PAD, PAD), (PAD, PAD)), mode="reflect")
    inv_k2 = jnp.float32(1.0 / (KSIZE * KSIZE))

    var = None
    xm = None
    for c in range(C):
        xc = xp[:, c]
        xc2 = xc * xc
        rs = xc[:, 0:H, :]
        rs2 = xc2[:, 0:H, :]
        for di in range(1, KSIZE):
            rs = rs + xc[:, di:di + H, :]
            rs2 = rs2 + xc2[:, di:di + H, :]
        s = rs[:, :, 0:W]
        s2 = rs2[:, :, 0:W]
        for dj in range(1, KSIZE):
            s = s + rs[:, :, dj:dj + W]
            s2 = s2 + rs2[:, :, dj:dj + W]
        lm = s * inv_k2
        vc = s2 * inv_k2 - lm * lm               # (B, H, W)
        xcen = x[:, c]
        if c == 0:
            var, xm = vc, xcen
        else:
            var, xm = var + vc, xm + xcen

    inv_c = jnp.float32(1.0 / C)
    var = var * inv_c                            # (B, H, W)
    xm = xm * inv_c                              # (B, H, W)

    vmin, vmax = jnp.min(var), jnp.max(var)
    inv_range = jnp.float32(1.0) / (vmax - vmin)
    norm = (var - vmin) * inv_range
    c0 = jnp.float32(1.0 / (time_window - fire_window))
    lat = 1.0 / (norm + c0)                      # (B, H, W)

    t = jnp.arange(time_window, dtype=jnp.float32).reshape(1, 1, 1, -1)
    firing = (t >= lat[..., None]) & (t < lat[..., None] + jnp.float32(fire_window))
    return jnp.where((spike_prob < xm[..., None]) & firing,
                     jnp.float32(1.0), jnp.float32(0.0))


if __name__ == "__main__":
    B, C, H, W = 2, 4, 16, 16
    time_window = 8
    fire_window_ratio = 0.25                     # -> fire_window = 2

    key = jax.random.PRNGKey(0)
    k_x, k_prob = jax.random.split(key)
    x = jax.random.uniform(k_x, (B, C, H, W), jnp.float32)

    spikes, spike_prob = rl_encoder(x, k_prob, time_window, fire_window_ratio)
    spikes = jax.block_until_ready(spikes)

    ref = reference(x, spike_prob, time_window,
                    int(time_window * fire_window_ratio))
    assert spikes.shape == (B, H, W, time_window), spikes.shape
    assert jnp.allclose(spikes, ref, atol=1e-5), "mismatch vs pure-JAX reference"
    print("KERNEL_OK")
</pallas_src>

<mosaic_0001>
module attributes {stable_mosaic.version = 11 : i64} {
  func.func @variance_kernel(%arg0: i32, %arg1: memref<1x4x20x20xf32, #tpu.memory_space<vmem>>, %arg2: memref<1x16x16xf32, #tpu.memory_space<vmem>>, %arg3: memref<1x16x16xf32, #tpu.memory_space<vmem>>) attributes {dimension_semantics = [#tpu.dimension_semantics<parallel>], iteration_bounds = array<i64: 2>, scalar_prefetch = 0 : i64, scratch_operands = 0 : i64, tpu.core_type = #tpu.core_type<tc>, window_params = [{transform_indices = @transform_0, window_bounds = array<i64: 1, 4, 20, 20>}, {transform_indices = @transform_1, window_bounds = array<i64: 1, 16, 16>}, {transform_indices = @transform_2, window_bounds = array<i64: 1, 16, 16>}]} {
    %c0 = arith.constant 0 : index
    %c0_0 = arith.constant 0 : index
    %c0_1 = arith.constant 0 : index
    %c0_2 = arith.constant 0 : index
    %0 = vector.load %arg1[%c0, %c0_0, %c0_1, %c0_2] : memref<1x4x20x20xf32, #tpu.memory_space<vmem>>, vector<1x1x20x20xf32>
    %1 = vector.shape_cast %0 : vector<1x1x20x20xf32> to vector<20x20xf32>
    %2 = arith.mulf %1, %1 : vector<20x20xf32>
    %3 = vector.extract_strided_slice %1 {offsets = [0, 0], sizes = [16, 20], strides = [1, 1]} : vector<20x20xf32> to vector<16x20xf32>
    %4 = vector.extract_strided_slice %2 {offsets = [0, 0], sizes = [16, 20], strides = [1, 1]} : vector<20x20xf32> to vector<16x20xf32>
    %5 = vector.extract_strided_slice %1 {offsets = [1, 0], sizes = [16, 20], strides = [1, 1]} : vector<20x20xf32> to vector<16x20xf32>
    %6 = arith.addf %3, %5 : vector<16x20xf32>
    %7 = vector.extract_strided_slice %2 {offsets = [1, 0], sizes = [16, 20], strides = [1, 1]} : vector<20x20xf32> to vector<16x20xf32>
    %8 = arith.addf %4, %7 : vector<16x20xf32>
    %9 = vector.extract_strided_slice %1 {offsets = [2, 0], sizes = [16, 20], strides = [1, 1]} : vector<20x20xf32> to vector<16x20xf32>
    %10 = arith.addf %6, %9 : vector<16x20xf32>
    %11 = vector.extract_strided_slice %2 {offsets = [2, 0], sizes = [16, 20], strides = [1, 1]} : vector<20x20xf32> to vector<16x20xf32>
    %12 = arith.addf %8, %11 : vector<16x20xf32>
    %13 = vector.extract_strided_slice %1 {offsets = [3, 0], sizes = [16, 20], strides = [1, 1]} : vector<20x20xf32> to vector<16x20xf32>
    %14 = arith.addf %10, %13 : vector<16x20xf32>
    %15 = vector.extract_strided_slice %2 {offsets = [3, 0], sizes = [16, 20], strides = [1, 1]} : vector<20x20xf32> to vector<16x20xf32>
    %16 = arith.addf %12, %15 : vector<16x20xf32>
    %17 = vector.extract_strided_slice %1 {offsets = [4, 0], sizes = [16, 20], strides = [1, 1]} : vector<20x20xf32> to vector<16x20xf32>
    %18 = arith.addf %14, %17 : vector<16x20xf32>
    %19 = vector.extract_strided_slice %2 {offsets = [4, 0], sizes = [16, 20], strides = [1, 1]} : vector<20x20xf32> to vector<16x20xf32>
    %20 = arith.addf %16, %19 : vector<16x20xf32>
    %21 = vector.extract_strided_slice %18 {offsets = [0, 0], sizes = [16, 16], strides = [1, 1]} : vector<16x20xf32> to vector<16x16xf32>
    %22 = vector.extract_strided_slice %20 {offsets = [0, 0], sizes = [16, 16], strides = [1, 1]} : vector<16x20xf32> to vector<16x16xf32>
    %23 = vector.extract_strided_slice %18 {offsets = [0, 1], sizes = [16, 16], strides = [1, 1]} : vector<16x20xf32> to vector<16x16xf32>
    %24 = arith.addf %21, %23 : vector<16x16xf32>
    %25 = vector.extract_strided_slice %20 {offsets = [0, 1], sizes = [16, 16], strides = [1, 1]} : vector<16x20xf32> to vector<16x16xf32>
    %26 = arith.addf %22, %25 : vector<16x16xf32>
    %27 = vector.extract_strided_slice %18 {offsets = [0, 2], sizes = [16, 16], strides = [1, 1]} : vector<16x20xf32> to vector<16x16xf32>
    %28 = arith.addf %24, %27 : vector<16x16xf32>
    %29 = vector.extract_strided_slice %20 {offsets = [0, 2], sizes = [16, 16], strides = [1, 1]} : vector<16x20xf32> to vector<16x16xf32>
    %30 = arith.addf %26, %29 : vector<16x16xf32>
    %31 = vector.extract_strided_slice %18 {offsets = [0, 3], sizes = [16, 16], strides = [1, 1]} : vector<16x20xf32> to vector<16x16xf32>
    %32 = arith.addf %28, %31 : vector<16x16xf32>
    %33 = vector.extract_strided_slice %20 {offsets = [0, 3], sizes = [16, 16], strides = [1, 1]} : vector<16x20xf32> to vector<16x16xf32>
    %34 = arith.addf %30, %33 : vector<16x16xf32>
    %35 = vector.extract_strided_slice %18 {offsets = [0, 4], sizes = [16, 16], strides = [1, 1]} : vector<16x20xf32> to vector<16x16xf32>
    %36 = arith.addf %32, %35 : vector<16x16xf32>
    %37 = vector.extract_strided_slice %20 {offsets = [0, 4], sizes = [16, 16], strides = [1, 1]} : vector<16x20xf32> to vector<16x16xf32>
    %38 = arith.addf %34, %37 : vector<16x16xf32>
    %cst = arith.constant 4.000000e-02 : f32
    %39 = vector.broadcast %cst : f32 to vector<16x16xf32>
    %40 = arith.mulf %36, %39 : vector<16x16xf32>
    %cst_3 = arith.constant 4.000000e-02 : f32
    %41 = vector.broadcast %cst_3 : f32 to vector<16x16xf32>
    %42 = arith.mulf %38, %41 : vector<16x16xf32>
    %43 = arith.mulf %40, %40 : vector<16x16xf32>
    %44 = arith.subf %42, %43 : vector<16x16xf32>
    %45 = vector.extract_strided_slice %1 {offsets = [2, 2], sizes = [16, 16], strides = [1, 1]} : vector<20x20xf32> to vector<16x16xf32>
    %c0_4 = arith.constant 0 : index
    %c1 = arith.constant 1 : index
    %c0_5 = arith.constant 0 : index
    %c0_6 = arith.constant 0 : index
    %46 = vector.load %arg1[%c0_4, %c1, %c0_5, %c0_6] : memref<1x4x20x20xf32, #tpu.memory_space<vmem>>, vector<1x1x20x20xf32>
    %47 = vector.shape_cast %46 : vector<1x1x20x20xf32> to vector<20x20xf32>
    %48 = arith.mulf %47, %47 : vector<20x20xf32>
    %49 = vector.extract_strided_slice %47 {offsets = [0, 0], sizes = [16, 20], strides = [1, 1]} : vector<20x20xf32> to vector<16x20xf32>
    %50 = vector.extract_strided_slice %48 {offsets = [0, 0], sizes = [16, 20], strides = [1, 1]} : vector<20x20xf32> to vector<16x20xf32>
    %51 = vector.extract_strided_slice %47 {offsets = [1, 0], sizes = [16, 20], strides = [1, 1]} : vector<20x20xf32> to vector<16x20xf32>
    %52 = arith.addf %49, %51 : vector<16x20xf32>
    %53 = vector.extract_strided_slice %48 {offsets = [1, 0], sizes = [16, 20], strides = [1, 1]} : vector<20x20xf32> to vector<16x20xf32>
    %54 = arith.addf %50, %53 : vector<16x20xf32>
    %55 = vector.extract_strided_slice %47 {offsets = [2, 0], sizes = [16, 20], strides = [1, 1]} : vector<20x20xf32> to vector<16x20xf32>
    %56 = arith.addf %52, %55 : vector<16x20xf32>
    %57 = vector.extract_strided_slice %48 {offsets = [2, 0], sizes = [16, 20], strides = [1, 1]} : vector<20x20xf32> to vector<16x20xf32>
    %58 = arith.addf %54, %57 : vector<16x20xf32>
    %59 = vector.extract_strided_slice %47 {offsets = [3, 0], sizes = [16, 20], strides = [1, 1]} : vector<20x20xf32> to vector<16x20xf32>
    %60 = arith.addf %56, %59 : vector<16x20xf32>
    %61 = vector.extract_strided_slice %48 {offsets = [3, 0], sizes = [16, 20], strides = [1, 1]} : vector<20x20xf32> to vector<16x20xf32>
    %62 = arith.addf %58, %61 : vector<16x20xf32>
    %63 = vector.extract_strided_slice %47 {offsets = [4, 0], sizes = [16, 20], strides = [1, 1]} : vector<20x20xf32> to vector<16x20xf32>
    %64 = arith.addf %60, %63 : vector<16x20xf32>
    %65 = vector.extract_strided_slice %48 {offsets = [4, 0], sizes = [16, 20], strides = [1, 1]} : vector<20x20xf32> to vector<16x20xf32>
    %66 = arith.addf %62, %65 : vector<16x20xf32>
    %67 = vector.extract_strided_slice %64 {offsets = [0, 0], sizes = [16, 16], strides = [1, 1]} : vector<16x20xf32> to vector<16x16xf32>
    %68 = vector.extract_strided_slice %66 {offsets = [0, 0], sizes = [16, 16], strides = [1, 1]} : vector<16x20xf32> to vector<16x16xf32>
    %69 = vector.extract_strided_slice %64 {offsets = [0, 1], sizes = [16, 16], strides = [1, 1]} : vector<16x20xf32> to vector<16x16xf32>
    %70 = arith.addf %67, %69 : vector<16x16xf32>
    %71 = vector.extract_strided_slice %66 {offsets = [0, 1], sizes = [16, 16], strides = [1, 1]} : vector<16x20xf32> to vector<16x16xf32>
    %72 = arith.addf %68, %71 : vector<16x16xf32>
    %73 = vector.extract_strided_slice %64 {offsets = [0, 2], sizes = [16, 16], strides = [1, 1]} : vector<16x20xf32> to vector<16x16xf32>
    %74 = arith.addf %70, %73 : vector<16x16xf32>
    %75 = vector.extract_strided_slice %66 {offsets = [0, 2], sizes = [16, 16], strides = [1, 1]} : vector<16x20xf32> to vector<16x16xf32>
    %76 = arith.addf %72, %75 : vector<16x16xf32>
    %77 = vector.extract_strided_slice %64 {offsets = [0, 3], sizes = [16, 16], strides = [1, 1]} : vector<16x20xf32> to vector<16x16xf32>
    %78 = arith.addf %74, %77 : vector<16x16xf32>
    %79 = vector.extract_strided_slice %66 {offsets = [0, 3], sizes = [16, 16], strides = [1, 1]} : vector<16x20xf32> to vector<16x16xf32>
    %80 = arith.addf %76, %79 : vector<16x16xf32>
    %81 = vector.extract_strided_slice %64 {offsets = [0, 4], sizes = [16, 16], strides = [1, 1]} : vector<16x20xf32> to vector<16x16xf32>
    %82 = arith.addf %78, %81 : vector<16x16xf32>
    %83 = vector.extract_strided_slice %66 {offsets = [0, 4], sizes = [16, 16], strides = [1, 1]} : vector<16x20xf32> to vector<16x16xf32>
    %84 = arith.addf %80, %83 : vector<16x16xf32>
    %cst_7 = arith.constant 4.000000e-02 : f32
    %85 = vector.broadcast %cst_7 : f32 to vector<16x16xf32>
    %86 = arith.mulf %82, %85 : vector<16x16xf32>
    %cst_8 = arith.constant 4.000000e-02 : f32
    %87 = vector.broadcast %cst_8 : f32 to vector<16x16xf32>
    %88 = arith.mulf %84, %87 : vector<16x16xf32>
    %89 = arith.mulf %86, %86 : vector<16x16xf32>
    %90 = arith.subf %88, %89 : vector<16x16xf32>
    %91 = vector.extract_strided_slice %47 {offsets = [2, 2], sizes = [16, 16], strides = [1, 1]} : vector<20x20xf32> to vector<16x16xf32>
    %92 = arith.addf %44, %90 : vector<16x16xf32>
    %93 = arith.addf %45, %91 : vector<16x16xf32>
    %c0_9 = arith.constant 0 : index
    %c2 = arith.constant 2 : index
    %c0_10 = arith.constant 0 : index
    %c0_11 = arith.constant 0 : index
    %94 = vector.load %arg1[%c0_9, %c2, %c0_10, %c0_11] : memref<1x4x20x20xf32, #tpu.memory_space<vmem>>, vector<1x1x20x20xf32>
    %95 = vector.shape_cast %94 : vector<1x1x20x20xf32> to vector<20x20xf32>
    %96 = arith.mulf %95, %95 : vector<20x20xf32>
    %97 = vector.extract_strided_slice %95 {offsets = [0, 0], sizes = [16, 20], strides = [1, 1]} : vector<20x20xf32> to vector<16x20xf32>
    %98 = vector.extract_strided_slice %96 {offsets = [0, 0], sizes = [16, 20], strides = [1, 1]} : vector<20x20xf32> to vector<16x20xf32>
    %99 = vector.extract_strided_slice %95 {offsets = [1, 0], sizes = [16, 20], strides = [1, 1]} : vector<20x20xf32> to vector<16x20xf32>
    %100 = arith.addf %97, %99 : vector<16x20xf32>
    %101 = vector.extract_strided_slice %96 {offsets = [1, 0], sizes = [16, 20], strides = [1, 1]} : vector<20x20xf32> to vector<16x20xf32>
    %102 = arith.addf %98, %101 : vector<16x20xf32>
    %103 = vector.extract_strided_slice %95 {offsets = [2, 0], sizes = [16, 20], strides = [1, 1]} : vector<20x20xf32> to vector<16x20xf32>
    %104 = arith.addf %100, %103 : vector<16x20xf32>
    %105 = vector.extract_strided_slice %96 {offsets = [2, 0], sizes = [16, 20], strides = [1, 1]} : vector<20x20xf32> to vector<16x20xf32>
    %106 = arith.addf %102, %105 : vector<16x20xf32>
    %107 = vector.extract_strided_slice %95 {offsets = [3, 0], sizes = [16, 20], strides = [1, 1]} : vector<20x20xf32> to vector<16x20xf32>
    %108 = arith.addf %104, %107 : vector<16x20xf32>
    %109 = vector.extract_strided_slice %96 {offsets = [3, 0], sizes = [16, 20], strides = [1, 1]} : vector<20x20xf32> to vector<16x20xf32>
    %110 = arith.addf %106, %109 : vector<16x20xf32>
    %111 = vector.extract_strided_slice %95 {offsets = [4, 0], sizes = [16, 20], strides = [1, 1]} : vector<20x20xf32> to vector<16x20xf32>
    %112 = arith.addf %108, %111 : vector<16x20xf32>
    %113 = vector.extract_strided_slice %96 {offsets = [4, 0], sizes = [16, 20], strides = [1, 1]} : vector<20x20xf32> to vector<16x20xf32>
    %114 = arith.addf %110, %113 : vector<16x20xf32>
    %115 = vector.extract_strided_slice %112 {offsets = [0, 0], sizes = [16, 16], strides = [1, 1]} : vector<16x20xf32> to vector<16x16xf32>
    %116 = vector.extract_strided_slice %114 {offsets = [0, 0], sizes = [16, 16], strides = [1, 1]} : vector<16x20xf32> to vector<16x16xf32>
    %117 = vector.extract_strided_slice %112 {offsets = [0, 1], sizes = [16, 16], strides = [1, 1]} : vector<16x20xf32> to vector<16x16xf32>
    %118 = arith.addf %115, %117 : vector<16x16xf32>
    %119 = vector.extract_strided_slice %114 {offsets = [0, 1], sizes = [16, 16], strides = [1, 1]} : vector<16x20xf32> to vector<16x16xf32>
    %120 = arith.addf %116, %119 : vector<16x16xf32>
    %121 = vector.extract_strided_slice %112 {offsets = [0, 2], sizes = [16, 16], strides = [1, 1]} : vector<16x20xf32> to vector<16x16xf32>
    %122 = arith.addf %118, %121 : vector<16x16xf32>
    %123 = vector.extract_strided_slice %114 {offsets = [0, 2], sizes = [16, 16], strides = [1, 1]} : vector<16x20xf32> to vector<16x16xf32>
    %124 = arith.addf %120, %123 : vector<16x16xf32>
    %125 = vector.extract_strided_slice %112 {offsets = [0, 3], sizes = [16, 16], strides = [1, 1]} : vector<16x20xf32> to vector<16x16xf32>
    %126 = arith.addf %122, %125 : vector<16x16xf32>
    %127 = vector.extract_strided_slice %114 {offsets = [0, 3], sizes = [16, 16], strides = [1, 1]} : vector<16x20xf32> to vector<16x16xf32>
    %128 = arith.addf %124, %127 : vector<16x16xf32>
    %129 = vector.extract_strided_slice %112 {offsets = [0, 4], sizes = [16, 16], strides = [1, 1]} : vector<16x20xf32> to vector<16x16xf32>
    %130 = arith.addf %126, %129 : vector<16x16xf32>
    %131 = vector.extract_strided_slice %114 {offsets = [0, 4], sizes = [16, 16], strides = [1, 1]} : vector<16x20xf32> to vector<16x16xf32>
    %132 = arith.addf %128, %131 : vector<16x16xf32>
    %cst_12 = arith.constant 4.000000e-02 : f32
    %133 = vector.broadcast %cst_12 : f32 to vector<16x16xf32>
    %134 = arith.mulf %130, %133 : vector<16x16xf32>
    %cst_13 = arith.constant 4.000000e-02 : f32
    %135 = vector.broadcast %cst_13 : f32 to vector<16x16xf32>
    %136 = arith.mulf %132, %135 : vector<16x16xf32>
    %137 = arith.mulf %134, %134 : vector<16x16xf32>
    %138 = arith.subf %136, %137 : vector<16x16xf32>
    %139 = vector.extract_strided_slice %95 {offsets = [2, 2], sizes = [16, 16], strides = [1, 1]} : vector<20x20xf32> to vector<16x16xf32>
    %140 = arith.addf %92, %138 : vector<16x16xf32>
    %141 = arith.addf %93, %139 : vector<16x16xf32>
    %c0_14 = arith.constant 0 : index
    %c3 = arith.constant 3 : index
    %c0_15 = arith.constant 0 : index
    %c0_16 = arith.constant 0 : index
    %142 = vector.load %arg1[%c0_14, %c3, %c0_15, %c0_16] : memref<1x4x20x20xf32, #tpu.memory_space<vmem>>, vector<1x1x20x20xf32>
    %143 = vector.shape_cast %142 : vector<1x1x20x20xf32> to vector<20x20xf32>
    %144 = arith.mulf %143, %143 : vector<20x20xf32>
    %145 = vector.extract_strided_slice %143 {offsets = [0, 0], sizes = [16, 20], strides = [1, 1]} : vector<20x20xf32> to vector<16x20xf32>
    %146 = vector.extract_strided_slice %144 {offsets = [0, 0], sizes = [16, 20], strides = [1, 1]} : vector<20x20xf32> to vector<16x20xf32>
    %147 = vector.extract_strided_slice %143 {offsets = [1, 0], sizes = [16, 20], strides = [1, 1]} : vector<20x20xf32> to vector<16x20xf32>
    %148 = arith.addf %145, %147 : vector<16x20xf32>
    %149 = vector.extract_strided_slice %144 {offsets = [1, 0], sizes = [16, 20], strides = [1, 1]} : vector<20x20xf32> to vector<16x20xf32>
    %150 = arith.addf %146, %149 : vector<16x20xf32>
    %151 = vector.extract_strided_slice %143 {offsets = [2, 0], sizes = [16, 20], strides = [1, 1]} : vector<20x20xf32> to vector<16x20xf32>
    %152 = arith.addf %148, %151 : vector<16x20xf32>
    %153 = vector.extract_strided_slice %144 {offsets = [2, 0], sizes = [16, 20], strides = [1, 1]} : vector<20x20xf32> to vector<16x20xf32>
    %154 = arith.addf %150, %153 : vector<16x20xf32>
    %155 = vector.extract_strided_slice %143 {offsets = [3, 0], sizes = [16, 20], strides = [1, 1]} : vector<20x20xf32> to vector<16x20xf32>
    %156 = arith.addf %152, %155 : vector<16x20xf32>
    %157 = vector.extract_strided_slice %144 {offsets = [3, 0], sizes = [16, 20], strides = [1, 1]} : vector<20x20xf32> to vector<16x20xf32>
    %158 = arith.addf %154, %157 : vector<16x20xf32>
    %159 = vector.extract_strided_slice %143 {offsets = [4, 0], sizes = [16, 20], strides = [1, 1]} : vector<20x20xf32> to vector<16x20xf32>
    %160 = arith.addf %156, %159 : vector<16x20xf32>
    %161 = vector.extract_strided_slice %144 {offsets = [4, 0], sizes = [16, 20], strides = [1, 1]} : vector<20x20xf32> to vector<16x20xf32>
    %162 = arith.addf %158, %161 : vector<16x20xf32>
    %163 = vector.extract_strided_slice %160 {offsets = [0, 0], sizes = [16, 16], strides = [1, 1]} : vector<16x20xf32> to vector<16x16xf32>
    %164 = vector.extract_strided_slice %162 {offsets = [0, 0], sizes = [16, 16], strides = [1, 1]} : vector<16x20xf32> to vector<16x16xf32>
    %165 = vector.extract_strided_slice %160 {offsets = [0, 1], sizes = [16, 16], strides = [1, 1]} : vector<16x20xf32> to vector<16x16xf32>
    %166 = arith.addf %163, %165 : vector<16x16xf32>
    %167 = vector.extract_strided_slice %162 {offsets = [0, 1], sizes = [16, 16], strides = [1, 1]} : vector<16x20xf32> to vector<16x16xf32>
    %168 = arith.addf %164, %167 : vector<16x16xf32>
    %169 = vector.extract_strided_slice %160 {offsets = [0, 2], sizes = [16, 16], strides = [1, 1]} : vector<16x20xf32> to vector<16x16xf32>
    %170 = arith.addf %166, %169 : vector<16x16xf32>
    %171 = vector.extract_strided_slice %162 {offsets = [0, 2], sizes = [16, 16], strides = [1, 1]} : vector<16x20xf32> to vector<16x16xf32>
    %172 = arith.addf %168, %171 : vector<16x16xf32>
    %173 = vector.extract_strided_slice %160 {offsets = [0, 3], sizes = [16, 16], strides = [1, 1]} : vector<16x20xf32> to vector<16x16xf32>
    %174 = arith.addf %170, %173 : vector<16x16xf32>
    %175 = vector.extract_strided_slice %162 {offsets = [0, 3], sizes = [16, 16], strides = [1, 1]} : vector<16x20xf32> to vector<16x16xf32>
    %176 = arith.addf %172, %175 : vector<16x16xf32>
    %177 = vector.extract_strided_slice %160 {offsets = [0, 4], sizes = [16, 16], strides = [1, 1]} : vector<16x20xf32> to vector<16x16xf32>
    %178 = arith.addf %174, %177 : vector<16x16xf32>
    %179 = vector.extract_strided_slice %162 {offsets = [0, 4], sizes = [16, 16], strides = [1, 1]} : vector<16x20xf32> to vector<16x16xf32>
    %180 = arith.addf %176, %179 : vector<16x16xf32>
    %cst_17 = arith.constant 4.000000e-02 : f32
    %181 = vector.broadcast %cst_17 : f32 to vector<16x16xf32>
    %182 = arith.mulf %178, %181 : vector<16x16xf32>
    %cst_18 = arith.constant 4.000000e-02 : f32
    %183 = vector.broadcast %cst_18 : f32 to vector<16x16xf32>
    %184 = arith.mulf %180, %183 : vector<16x16xf32>
    %185 = arith.mulf %182, %182 : vector<16x16xf32>
    %186 = arith.subf %184, %185 : vector<16x16xf32>
    %187 = vector.extract_strided_slice %143 {offsets = [2, 2], sizes = [16, 16], strides = [1, 1]} : vector<20x20xf32> to vector<16x16xf32>
    %188 = arith.addf %140, %186 : vector<16x16xf32>
    %189 = arith.addf %141, %187 : vector<16x16xf32>
    %cst_19 = arith.constant 2.500000e-01 : f32
    %190 = vector.broadcast %cst_19 : f32 to vector<16x16xf32>
    %191 = arith.mulf %188, %190 : vector<16x16xf32>
    %c0_20 = arith.constant 0 : index
    %c0_21 = arith.constant 0 : index
    %c0_22 = arith.constant 0 : index
    %192 = vector.load %arg2[%c0_20, %c0_21, %c0_22] : memref<1x16x16xf32, #tpu.memory_space<vmem>>, vector<1x16x16xf32>
    %193 = vector.shape_cast %192 : vector<1x16x16xf32> to vector<16x16xf32>
    %194 = vector.shape_cast %191 : vector<16x16xf32> to vector<1x16x16xf32>
    tpu.vector_store %arg2[%c0_20, %c0_21, %c0_22], %194 {strides = array<i32>} : memref<1x16x16xf32, #tpu.memory_space<vmem>>, vector<1x16x16xf32>,
    %cst_23 = arith.constant 2.500000e-01 : f32
    %195 = vector.broadcast %cst_23 : f32 to vector<16x16xf32>
    %196 = arith.mulf %189, %195 : vector<16x16xf32>
    %c0_24 = arith.constant 0 : index
    %c0_25 = arith.constant 0 : index
    %c0_26 = arith.constant 0 : index
    %197 = vector.load %arg3[%c0_24, %c0_25, %c0_26] : memref<1x16x16xf32, #tpu.memory_space<vmem>>, vector<1x16x16xf32>
    %198 = vector.shape_cast %197 : vector<1x16x16xf32> to vector<16x16xf32>
    %199 = vector.shape_cast %196 : vector<16x16xf32> to vector<1x16x16xf32>
    tpu.vector_store %arg3[%c0_24, %c0_25, %c0_26], %199 {strides = array<i32>} : memref<1x16x16xf32, #tpu.memory_space<vmem>>, vector<1x16x16xf32>,
    return
  }
  func.func @transform_0(%arg0: i32) -> (i32, i32, i32, i32) {
    %c0_i32 = arith.constant 0 : i32
    %c0_i32_0 = arith.constant 0 : i32
    %c0_i32_1 = arith.constant 0 : i32
    %c0_i32_2 = arith.constant 0 : i32
    return %arg0, %c0_i32, %c0_i32_0, %c0_i32_1 : i32, i32, i32, i32
  }
  func.func @transform_1(%arg0: i32) -> (i32, i32, i32) {
    %c0_i32 = arith.constant 0 : i32
    %c0_i32_0 = arith.constant 0 : i32
    %c0_i32_1 = arith.constant 0 : i32
    return %arg0, %c0_i32, %c0_i32_0 : i32, i32, i32
  }
  func.func @transform_2(%arg0: i32) -> (i32, i32, i32) {
    %c0_i32 = arith.constant 0 : i32
    %c0_i32_0 = arith.constant 0 : i32
    %c0_i32_1 = arith.constant 0 : i32
    return %arg0, %c0_i32, %c0_i32_0 : i32, i32, i32
  }
}

</mosaic_0001>

<llo_original>
// kernel: tpu_custom_call.1
$region0: #{tpu_custom_call.1}
  #allocation0 [shape = 'u32[]', space=smem, size = 0x4, offset = 0x4, fixed_abs, tag = 'smem constant byte address 0x4 - core index']
  #allocation1 [shape = 'u32[144,128]{1,0:T(1,128)}', space=vmem, size = 0x12000, scoped, tag = 'internal scratch']
  %s0 = inlined_call_operand.vmem [shape: f32[2,4,20,20], index: 0, kind: input, shape index: {}]
  %s1 = inlined_call_operand.hbm [shape: f32[2,16,16], index: 1, kind: output, shape index: {0}]
  %s2 = inlined_call_operand.hbm [shape: f32[2,16,16], index: 2, kind: output, shape index: {1}]
  %3 = xla_tuple %s1, %s2
  %s4 = sld [smem:[#allocation0]]
  $region45: #{tpu_custom_call.1} parent=0
    _
  %s6 = ssub.s32 1, %s4
  %s7 = scalar_select 0, %s6, %s4
  $region1: #{tpu_custom_call.1} parent=0
    #allocation2 [shape = 'u8[16384]{0}', space=vmem, size = 0x4000, scoped, tag = 'output window, operand 0']
    #allocation3 [shape = 's32[2]{0}', space=sflag, size = 0x8, scoped, tag = 'scoped memory for tpu_custom_call.1']
    #allocation4 [shape = 'u8[16384]{0}', space=vmem, size = 0x4000, scoped, tag = 'output window, operand 1']
    #allocation5 [shape = 's32[2]{0}', space=sflag, size = 0x8, scoped, tag = 'scoped memory for tpu_custom_call.1']
    %8 = vsyncpa [#allocation3], 0
    %s9 = scalar_lea.sflag [#allocation3], 1
    %10 = vsyncpa %s9, 0
    %11 = vsyncpa [#allocation5], 0
    %s12 = scalar_lea.sflag [#allocation5], 1
    %13 = vsyncpa %s12, 0
    loop: start=0, step=1, limit=4
    $region2: #{tpu_custom_call.1} parent=1 // loop_pre_header
      _
    $region3: #{tpu_custom_call.1} parent=1 // loop_header
      %s15 = sphi 0, %s19
      %p16 = scmp.ge.s32.totalorder %s15, 4
      %s25 = sphi 0, %s27
      %s28 = sphi 0, %s25
      %s29 = sphi 0, %s28
      %s45 = sphi 0, %s29
      %s51 = sphi 0, %s53
      %s54 = sphi 0, %s51
      %s55 = sphi 0, %s54
      %s71 = sphi 0, %s55
      %s77 = sphi 0, %s79
      %s80 = sphi 0, %s77
      %s81 = sphi 0, %s80
      %s97 = sphi 0, %s81
    $region4: #{tpu_custom_call.1} parent=1 // loop_header_branch
      %18 = sbr.rel (%p16) target = $region8
    $region5: #{tpu_custom_call.1} parent=1 // loop_body
      %s20 = ssub.s32 %s15, 1
      %s21 = ssub.s32 %s15, 2
      %s22 = sadd.s32 %s15, 1
      %s23 = ssub.s32 %s15, %s22
      %p24 = scmp.eq.s32.totalorder %s23, 0
      %s26 = sadd.s32 %s25, 1
      %s27 = scalar_select %p24, %s25, %s26
      %p30 = pneg %p24
      %p31 = scmp.eq.s32.totalorder %s15, 1
      %p32 = por %p30, %p31
      %p33 = scmp.ne.s32.totalorder %s25, %s28
      %p34 = scmp.eq.s32.totalorder %s15, 0
      %p35 = por %p33, %p34
      %p36 = scmp.ne.s32.totalorder %s25, %s28
      %p37 = scmp.eq.s32.totalorder %s20, 1
      %p38 = por %p36, %p37
      %p39 = scmp.ne.s32.totalorder %s28, %s29
      %p40 = scmp.eq.s32.totalorder %s20, 0
      %p41 = por %p39, %p40
      %p42 = scmp.ne.s32.totalorder %s28, %s29
      %p43 = scmp.eq.s32.totalorder %s21, 1
      %p44 = por %p42, %p43
      %p46 = scmp.ne.s32.totalorder %s29, %s45
      %p47 = scmp.eq.s32.totalorder %s21, 0
      %p48 = por %p46, %p47
      %s49 = ssub.s32 %s15, %s22
      %p50 = scmp.eq.s32.totalorder %s49, 0
      %s52 = sadd.s32 %s51, 1
      %s53 = scalar_select %p50, %s51, %s52
      %p56 = pneg %p50
      %p57 = scmp.eq.s32.totalorder %s15, 1
      %p58 = por %p56, %p57
      %p59 = scmp.ne.s32.totalorder %s51, %s54
      %p60 = scmp.eq.s32.totalorder %s15, 0
      %p61 = por %p59, %p60
      %p62 = scmp.ne.s32.totalorder %s51, %s54
      %p63 = scmp.eq.s32.totalorder %s20, 1
      %p64 = por %p62, %p63
      %p65 = scmp.ne.s32.totalorder %s54, %s55
      %p66 = scmp.eq.s32.totalorder %s20, 0
      %p67 = por %p65, %p66
      %p68 = scmp.ne.s32.totalorder %s54, %s55
      %p69 = scmp.eq.s32.totalorder %s21, 1
      %p70 = por %p68, %p69
      %p72 = scmp.ne.s32.totalorder %s55, %s71
      %p73 = scmp.eq.s32.totalorder %s21, 0
      %p74 = por %p72, %p73
      %s75 = ssub.s32 %s15, %s22
      %p76 = scmp.eq.s32.totalorder %s75, 0
      %s78 = sadd.s32 %s77, 1
      %s79 = scalar_select %p76, %s77, %s78
      %p82 = pneg %p76
      %p83 = scmp.eq.s32.totalorder %s15, 1
      %p84 = por %p82, %p83
      %p85 = scmp.ne.s32.totalorder %s77, %s80
      %p86 = scmp.eq.s32.totalorder %s15, 0
      %p87 = por %p85, %p86
      %p88 = scmp.ne.s32.totalorder %s77, %s80
      %p89 = scmp.eq.s32.totalorder %s20, 1
      %p90 = por %p88, %p89
      %p91 = scmp.ne.s32.totalorder %s80, %s81
      %p92 = scmp.eq.s32.totalorder %s20, 0
      %p93 = por %p91, %p92
      %p94 = scmp.ne.s32.totalorder %s80, %s81
      %p95 = scmp.eq.s32.totalorder %s21, 1
      %p96 = por %p94, %p95
      %p98 = scmp.ne.s32.totalorder %s81, %s97
      %p99 = scmp.eq.s32.totalorder %s21, 0
      %p100 = por %p98, %p99
      %p101 = scmp.le.s32.totalorder 1, %s15
      %p102 = scmp.lt.s32.totalorder %s15, 3
      %p103 = pnand %p101, %p102
      %p104 = pneg %p103
      // Predicated region
      $region9: #{tpu_custom_call.1} parent=5 // pred_check
        _
      $region10: #{tpu_custom_call.1} parent=5 // pred_check_branch
        %106 = sbr.rel (%p103) target = $region12
      $region11: #{tpu_custom_call.1} parent=5 // pred_region
        %s107 = ssub.s32 %s15, 1
      $region12: #{tpu_custom_call.1} parent=5 // pred_fallthru
        _
      %p108 = scmp.lt.s32.totalorder %s15, 2
      // Predicated region
      $region13: #{tpu_custom_call.1} parent=5 // pred_check
        %p109 = pneg %p108
      $region14: #{tpu_custom_call.1} parent=5 // pred_check_branch
        %111 = sbr.rel (%p109) target = $region16
      $region15: #{tpu_custom_call.1} parent=5 // pred_region
        // Predicated region
        $region17: #{tpu_custom_call.1} parent=15 // pred_check
          %p112 = pneg %p35
        $region18: #{tpu_custom_call.1} parent=15 // pred_check_branch
          %114 = sbr.rel (%p112) target = $region20
        $region19: #{tpu_custom_call.1} parent=15 // pred_region
          %p115 = scmp.lt.s32.totalorder %s15, 1
          %s116 = scalar_select %p115, %s15, 1
          %s117 = smul.addr %s116, 12
          %s118 = smul.addr %s117, 8
          %s119 = scalar_lea.vmem %s0, %s118
        $region20: #{tpu_custom_call.1} parent=15 // pred_fallthru
          _
      $region16: #{tpu_custom_call.1} parent=5 // pred_fallthru
        _
      %p120 = scmp.le.s32.totalorder 1, %s15
      %p121 = scmp.lt.s32.totalorder %s15, 3
      %p122 = pnand %p120, %p121
      %p123 = pneg %p122
      // Predicated region
      $region21: #{tpu_custom_call.1} parent=5 // pred_check
        _
      $region22: #{tpu_custom_call.1} parent=5 // pred_check_branch
        %125 = sbr.rel (%p122) target = $region24
      $region23: #{tpu_custom_call.1} parent=5 // pred_region
        %s126 = ssub.s32 %s15, 1
        %p127 = scmp.lt.s32.totalorder %s20, 1
        %s128 = scalar_select %p127, %s20, 1
        %s129 = smul.addr %s128, 12
        %s130 = smul.addr %s129, 8
        %s131 = scalar_lea.vmem %s0, %s130
        %p132 = pneg %p41
        %p133 = pneg %p38
        %p134 = pneg %p67
        %p135 = pneg %p64
        %s136 = sand.u32 %s54, 1
        %s137 = scalar_lea.sflag [#allocation3], %s136
        %s138 = sand.u32 %s54, 1
        %s139 = smul.addr %s138, 16
        %s140 = scalar_lea.vmem [#allocation2], %s139
        %p141 = pneg %p93
        %p142 = pneg %p90
        %s143 = sand.u32 %s80, 1
        %s144 = scalar_lea.sflag [#allocation5], %s143
        %s145 = sand.u32 %s80, 1
        %s146 = smul.addr %s145, 16
        %s147 = scalar_lea.vmem [#allocation4], %s146
        %p148 = scmp.lt.s32.totalorder %s20, 1
        %s149 = scalar_select %p148, %s20, 1
        %s150 = smul.addr %s149, 12
        %s151 = smul.addr %s150, 8
        %s152 = scalar_lea.vmem %s0, %s151
        %v153 = vld [vmem:[%s152] sm:$0xff]
        %v154 = vld [vmem:[%s152 + $0x8] sm:$0xff]
        %v155 = vld [vmem:[%s152 + $0x10] sm:$0xf]
        %v156 = vmul.f32 %v153, %v153
        %v157 = vmul.f32 %v154, %v154
        %v158 = vmul.f32 %v155, %v155
        %vm162 = vcmask 1046528
        %v163 = vrot.slane %v153, 1
        %v164 = vrot.slane %v154, 1
        %v165 = vsel %vm162, %v163, %v164
        %v166 = vrot.slane %v155, 1
        %v167 = vsel %vm162, %v164, %v166
        %v170 = vadd.f32 %v153, %v165
        %v171 = vadd.f32 %v154, %v167
        %v175 = vrot.slane %v156, 1
        %v176 = vrot.slane %v157, 1
        %v177 = vsel %vm162, %v175, %v176
        %v178 = vrot.slane %v158, 1
        %v179 = vsel %vm162, %v176, %v178
        %v182 = vadd.f32 %v156, %v177
        %v183 = vadd.f32 %v157, %v179
        %vm184 = vcmask 1045504
        %v185 = vrot.slane %v153, 2
        %v186 = vrot.slane %v154, 2
        %v187 = vsel %vm184, %v185, %v186
        %v188 = vrot.slane %v155, 2
        %v189 = vsel %vm184, %v186, %v188
        %v192 = vadd.f32 %v170, %v187
        %v193 = vadd.f32 %v171, %v189
        %v194 = vrot.slane %v156, 2
        %v195 = vrot.slane %v157, 2
        %v196 = vsel %vm184, %v194, %v195
        %v197 = vrot.slane %v158, 2
        %v198 = vsel %vm184, %v195, %v197
        %v201 = vadd.f32 %v182, %v196
        %v202 = vadd.f32 %v183, %v198
        %vm203 = vcmask 1044480
        %v204 = vrot.slane %v153, 3
        %v205 = vrot.slane %v154, 3
        %v206 = vsel %vm203, %v204, %v205
        %v207 = vrot.slane %v155, 3
        %v208 = vsel %vm203, %v205, %v207
        %v211 = vadd.f32 %v192, %v206
        %v212 = vadd.f32 %v193, %v208
        %v213 = vrot.slane %v156, 3
        %v214 = vrot.slane %v157, 3
        %v215 = vsel %vm203, %v213, %v214
        %v216 = vrot.slane %v158, 3
        %v217 = vsel %vm203, %v214, %v216
        %v220 = vadd.f32 %v201, %v215
        %v221 = vadd.f32 %v202, %v217
        %vm222 = vcmask 1043456
        %v223 = vrot.slane %v153, 4
        %v224 = vrot.slane %v154, 4
        %v225 = vsel %vm222, %v223, %v224
        %v226 = vrot.slane %v155, 4
        %v227 = vsel %vm222, %v224, %v226
        %v230 = vadd.f32 %v211, %v225
        %v231 = vadd.f32 %v212, %v227
        %v232 = vrot.slane %v156, 4
        %v233 = vrot.slane %v157, 4
        %v234 = vsel %vm222, %v232, %v233
        %v235 = vrot.slane %v158, 4
        %v236 = vsel %vm222, %v233, %v235
        %v239 = vadd.f32 %v220, %v234
        %v240 = vadd.f32 %v221, %v236
        %243 = vrot.lane.b32.xlu0 %v230, 127
        %v244 = vpop.permute.xlu0 %243
        %245 = vrot.lane.b32.xlu0 %v231, 127
        %v246 = vpop.permute.xlu0 %245
        %v249 = vadd.f32 %v230, %v244
        %v250 = vadd.f32 %v231, %v246
        %253 = vrot.lane.b32.xlu0 %v239, 127
        %v254 = vpop.permute.xlu0 %253
        %255 = vrot.lane.b32.xlu0 %v240, 127
        %v256 = vpop.permute.xlu0 %255
        %v259 = vadd.f32 %v239, %v254
        %v260 = vadd.f32 %v240, %v256
        %261 = vrot.lane.b32.xlu0 %v230, 126
        %v262 = vpop.permute.xlu0 %261
        %263 = vrot.lane.b32.xlu0 %v231, 126
        %v264 = vpop.permute.xlu0 %263
        %v267 = vadd.f32 %v249, %v262
        %v268 = vadd.f32 %v250, %v264
        %269 = vrot.lane.b32.xlu0 %v239, 126
        %v270 = vpop.permute.xlu0 %269
        %271 = vrot.lane.b32.xlu0 %v240, 126
        %v272 = vpop.permute.xlu0 %271
        %v275 = vadd.f32 %v259, %v270
        %v276 = vadd.f32 %v260, %v272
        %277 = vrot.lane.b32.xlu0 %v230, 125
        %v278 = vpop.permute.xlu0 %277
        %279 = vrot.lane.b32.xlu0 %v231, 125
        %v280 = vpop.permute.xlu0 %279
        %v283 = vadd.f32 %v267, %v278
        %v284 = vadd.f32 %v268, %v280
        %285 = vrot.lane.b32.xlu0 %v239, 125
        %v286 = vpop.permute.xlu0 %285
        %287 = vrot.lane.b32.xlu0 %v240, 125
        %v288 = vpop.permute.xlu0 %287
        %v291 = vadd.f32 %v275, %v286
        %v292 = vadd.f32 %v276, %v288
        %293 = vrot.lane.b32.xlu0 %v230, 124
        %v294 = vpop.permute.xlu0 %293
        %295 = vrot.lane.b32.xlu0 %v231, 124
        %v296 = vpop.permute.xlu0 %295
        %v299 = vadd.f32 %v283, %v294
        %v300 = vadd.f32 %v284, %v296
        %301 = vrot.lane.b32.xlu0 %v239, 124
        %v302 = vpop.permute.xlu0 %301
        %303 = vrot.lane.b32.xlu0 %v240, 124
        %v304 = vpop.permute.xlu0 %303
        %v307 = vadd.f32 %v291, %v302
        %v308 = vadd.f32 %v292, %v304
        %v309 = vmul.f32 %v299, 0.04
        %v310 = vmul.f32 %v300, 0.04
        %v311 = vmul.f32 %v307, 0.04
        %v312 = vmul.f32 %v308, 0.04
        %v313 = vmul.f32 %v309, %v309
        %v314 = vmul.f32 %v310, %v310
        %v315 = vsub.f32 %v311, %v313
        %v316 = vsub.f32 %v312, %v314
        %s317 = scalar_lea.vmem %s152, 24
        %v318 = vld [vmem:[%s317] sm:$0xff]
        %v319 = vld [vmem:[%s317 + $0x8] sm:$0xff]
        %v320 = vld [vmem:[%s317 + $0x10] sm:$0xf]
        %v321 = vmul.f32 %v318, %v318
        %v322 = vmul.f32 %v319, %v319
        %v323 = vmul.f32 %v320, %v320
        %v327 = vrot.slane %v318, 1
        %v328 = vrot.slane %v319, 1
        %v329 = vsel %vm162, %v327, %v328
        %v330 = vrot.slane %v320, 1
        %v331 = vsel %vm162, %v328, %v330
        %v334 = vadd.f32 %v318, %v329
        %v335 = vadd.f32 %v319, %v331
        %v339 = vrot.slane %v321, 1
        %v340 = vrot.slane %v322, 1
        %v341 = vsel %vm162, %v339, %v340
        %v342 = vrot.slane %v323, 1
        %v343 = vsel %vm162, %v340, %v342
        %v346 = vadd.f32 %v321, %v341
        %v347 = vadd.f32 %v322, %v343
        %v348 = vrot.slane %v318, 2
        %v349 = vrot.slane %v319, 2
        %v350 = vsel %vm184, %v348, %v349
        %v351 = vrot.slane %v320, 2
        %v352 = vsel %vm184, %v349, %v351
        %v355 = vadd.f32 %v334, %v350
        %v356 = vadd.f32 %v335, %v352
        %v357 = vrot.slane %v321, 2
        %v358 = vrot.slane %v322, 2
        %v359 = vsel %vm184, %v357, %v358
        %v360 = vrot.slane %v323, 2
        %v361 = vsel %vm184, %v358, %v360
        %v364 = vadd.f32 %v346, %v359
        %v365 = vadd.f32 %v347, %v361
        %v366 = vrot.slane %v318, 3
        %v367 = vrot.slane %v319, 3
        %v368 = vsel %vm203, %v366, %v367
        %v369 = vrot.slane %v320, 3
        %v370 = vsel %vm203, %v367, %v369
        %v373 = vadd.f32 %v355, %v368
        %v374 = vadd.f32 %v356, %v370
        %v375 = vrot.slane %v321, 3
        %v376 = vrot.slane %v322, 3
        %v377 = vsel %vm203, %v375, %v376
        %v378 = vrot.slane %v323, 3
        %v379 = vsel %vm203, %v376, %v378
        %v382 = vadd.f32 %v364, %v377
        %v383 = vadd.f32 %v365, %v379
        %v384 = vrot.slane %v318, 4
        %v385 = vrot.slane %v319, 4
        %v386 = vsel %vm222, %v384, %v385
        %v387 = vrot.slane %v320, 4
        %v388 = vsel %vm222, %v385, %v387
        %v391 = vadd.f32 %v373, %v386
        %v392 = vadd.f32 %v374, %v388
        %v393 = vrot.slane %v321, 4
        %v394 = vrot.slane %v322, 4
        %v395 = vsel %vm222, %v393, %v394
        %v396 = vrot.slane %v323, 4
        %v397 = vsel %vm222, %v394, %v396
        %v400 = vadd.f32 %v382, %v395
        %v401 = vadd.f32 %v383, %v397
        %404 = vrot.lane.b32.xlu0 %v391, 127
        %v405 = vpop.permute.xlu0 %404
        %406 = vrot.lane.b32.xlu0 %v392, 127
        %v407 = vpop.permute.xlu0 %406
        %v410 = vadd.f32 %v391, %v405
        %v411 = vadd.f32 %v392, %v407
        %414 = vrot.lane.b32.xlu0 %v400, 127
        %v415 = vpop.permute.xlu0 %414
        %416 = vrot.lane.b32.xlu0 %v401, 127
        %v417 = vpop.permute.xlu0 %416
        %v420 = vadd.f32 %v400, %v415
        %v421 = vadd.f32 %v401, %v417
        %422 = vrot.lane.b32.xlu0 %v391, 126
        %v423 = vpop.permute.xlu0 %422
        %424 = vrot.lane.b32.xlu0 %v392, 126
        %v425 = vpop.permute.xlu0 %424
        %v428 = vadd.f32 %v410, %v423
        %v429 = vadd.f32 %v411, %v425
        %430 = vrot.lane.b32.xlu0 %v400, 126
        %v431 = vpop.permute.xlu0 %430
        %432 = vrot.lane.b32.xlu0 %v401, 126
        %v433 = vpop.permute.xlu0 %432
        %v436 = vadd.f32 %v420, %v431
        %v437 = vadd.f32 %v421, %v433
        %438 = vrot.lane.b32.xlu0 %v391, 125
        %v439 = vpop.permute.xlu0 %438
        %440 = vrot.lane.b32.xlu0 %v392, 125
        %v441 = vpop.permute.xlu0 %440
        %v444 = vadd.f32 %v428, %v439
        %v445 = vadd.f32 %v429, %v441
        %446 = vrot.lane.b32.xlu0 %v400, 125
        %v447 = vpop.permute.xlu0 %446
        %448 = vrot.lane.b32.xlu0 %v401, 125
        %v449 = vpop.permute.xlu0 %448
        %v452 = vadd.f32 %v436, %v447
        %v453 = vadd.f32 %v437, %v449
        %454 = vrot.lane.b32.xlu0 %v391, 124
        %v455 = vpop.permute.xlu0 %454
        %456 = vrot.lane.b32.xlu0 %v392, 124
        %v457 = vpop.permute.xlu0 %456
        %v460 = vadd.f32 %v444, %v455
        %v461 = vadd.f32 %v445, %v457
        %462 = vrot.lane.b32.xlu0 %v400, 124
        %v463 = vpop.permute.xlu0 %462
        %464 = vrot.lane.b32.xlu0 %v401, 124
        %v465 = vpop.permute.xlu0 %464
        %v468 = vadd.f32 %v452, %v463
        %v469 = vadd.f32 %v453, %v465
        %v470 = vmul.f32 %v460, 0.04
        %v471 = vmul.f32 %v461, 0.04
        %v472 = vmul.f32 %v468, 0.04
        %v473 = vmul.f32 %v469, 0.04
        %v474 = vmul.f32 %v470, %v470
        %v475 = vmul.f32 %v471, %v471
        %v476 = vsub.f32 %v472, %v474
        %v477 = vsub.f32 %v473, %v475
        %v478 = vadd.f32 %v315, %v476
        %v479 = vadd.f32 %v316, %v477
        %v480 = vadd.f32 %v153, %v318
        %v481 = vadd.f32 %v154, %v319
        %v482 = vadd.f32 %v155, %v320
        %s483 = scalar_lea.vmem %s152, 48
        %v484 = vld [vmem:[%s483] sm:$0xff]
        %v485 = vld [vmem:[%s483 + $0x8] sm:$0xff]
        %v486 = vld [vmem:[%s483 + $0x10] sm:$0xf]
        %v487 = vmul.f32 %v484, %v484
        %v488 = vmul.f32 %v485, %v485
        %v489 = vmul.f32 %v486, %v486
        %v493 = vrot.slane %v484, 1
        %v494 = vrot.slane %v485, 1
        %v495 = vsel %vm162, %v493, %v494
        %v496 = vrot.slane %v486, 1
        %v497 = vsel %vm162, %v494, %v496
        %v500 = vadd.f32 %v484, %v495
        %v501 = vadd.f32 %v485, %v497
        %v505 = vrot.slane %v487, 1
        %v506 = vrot.slane %v488, 1
        %v507 = vsel %vm162, %v505, %v506
        %v508 = vrot.slane %v489, 1
        %v509 = vsel %vm162, %v506, %v508
        %v512 = vadd.f32 %v487, %v507
        %v513 = vadd.f32 %v488, %v509
        %v514 = vrot.slane %v484, 2
        %v515 = vrot.slane %v485, 2
        %v516 = vsel %vm184, %v514, %v515
        %v517 = vrot.slane %v486, 2
        %v518 = vsel %vm184, %v515, %v517
        %v521 = vadd.f32 %v500, %v516
        %v522 = vadd.f32 %v501, %v518
        %v523 = vrot.slane %v487, 2
        %v524 = vrot.slane %v488, 2
        %v525 = vsel %vm184, %v523, %v524
        %v526 = vrot.slane %v489, 2
        %v527 = vsel %vm184, %v524, %v526
        %v530 = vadd.f32 %v512, %v525
        %v531 = vadd.f32 %v513, %v527
        %v532 = vrot.slane %v484, 3
        %v533 = vrot.slane %v485, 3
        %v534 = vsel %vm203, %v532, %v533
        %v535 = vrot.slane %v486, 3
        %v536 = vsel %vm203, %v533, %v535
        %v539 = vadd.f32 %v521, %v534
        %v540 = vadd.f32 %v522, %v536
        %v541 = vrot.slane %v487, 3
        %v542 = vrot.slane %v488, 3
        %v543 = vsel %vm203, %v541, %v542
        %v544 = vrot.slane %v489, 3
        %v545 = vsel %vm203, %v542, %v544
        %v548 = vadd.f32 %v530, %v543
        %v549 = vadd.f32 %v531, %v545
        %v550 = vrot.slane %v484, 4
        %v551 = vrot.slane %v485, 4
        %v552 = vsel %vm222, %v550, %v551
        %v553 = vrot.slane %v486, 4
        %v554 = vsel %vm222, %v551, %v553
        %v557 = vadd.f32 %v539, %v552
        %v558 = vadd.f32 %v540, %v554
        %v559 = vrot.slane %v487, 4
        %v560 = vrot.slane %v488, 4
        %v561 = vsel %vm222, %v559, %v560
        %v562 = vrot.slane %v489, 4
        %v563 = vsel %vm222, %v560, %v562
        %v566 = vadd.f32 %v548, %v561
        %v567 = vadd.f32 %v549, %v563
        %570 = vrot.lane.b32.xlu0 %v557, 127
        %v571 = vpop.permute.xlu0 %570
        %572 = vrot.lane.b32.xlu0 %v558, 127
        %v573 = vpop.permute.xlu0 %572
        %v576 = vadd.f32 %v557, %v571
        %v577 = vadd.f32 %v558, %v573
        %580 = vrot.lane.b32.xlu0 %v566, 127
        %v581 = vpop.permute.xlu0 %580
        %582 = vrot.lane.b32.xlu0 %v567, 127
        %v583 = vpop.permute.xlu0 %582
        %v586 = vadd.f32 %v566, %v581
        %v587 = vadd.f32 %v567, %v583
        %588 = vrot.lane.b32.xlu0 %v557, 126
        %v589 = vpop.permute.xlu0 %588
        %590 = vrot.lane.b32.xlu0 %v558, 126
        %v591 = vpop.permute.xlu0 %590
        %v594 = vadd.f32 %v576, %v589
        %v595 = vadd.f32 %v577, %v591
        %596 = vrot.lane.b32.xlu0 %v566, 126
        %v597 = vpop.permute.xlu0 %596
        %598 = vrot.lane.b32.xlu0 %v567, 126
        %v599 = vpop.permute.xlu0 %598
        %v602 = vadd.f32 %v586, %v597
        %v603 = vadd.f32 %v587, %v599
        %604 = vrot.lane.b32.xlu0 %v557, 125
        %v605 = vpop.permute.xlu0 %604
        %606 = vrot.lane.b32.xlu0 %v558, 125
        %v607 = vpop.permute.xlu0 %606
        %v610 = vadd.f32 %v594, %v605
        %v611 = vadd.f32 %v595, %v607
        %612 = vrot.lane.b32.xlu0 %v566, 125
        %v613 = vpop.permute.xlu0 %612
        %614 = vrot.lane.b32.xlu0 %v567, 125
        %v615 = vpop.permute.xlu0 %614
        %v618 = vadd.f32 %v602, %v613
        %v619 = vadd.f32 %v603, %v615
        %620 = vrot.lane.b32.xlu0 %v557, 124
        %v621 = vpop.permute.xlu0 %620
        %622 = vrot.lane.b32.xlu0 %v558, 124
        %v623 = vpop.permute.xlu0 %622
        %v626 = vadd.f32 %v610, %v621
        %v627 = vadd.f32 %v611, %v623
        %628 = vrot.lane.b32.xlu0 %v566, 124
        %v629 = vpop.permute.xlu0 %628
        %630 = vrot.lane.b32.xlu0 %v567, 124
        %v631 = vpop.permute.xlu0 %630
        %v634 = vadd.f32 %v618, %v629
        %v635 = vadd.f32 %v619, %v631
        %v636 = vmul.f32 %v626, 0.04
        %v637 = vmul.f32 %v627, 0.04
        %v638 = vmul.f32 %v634, 0.04
        %v639 = vmul.f32 %v635, 0.04
        %v640 = vmul.f32 %v636, %v636
        %v641 = vmul.f32 %v637, %v637
        %v642 = vsub.f32 %v638, %v640
        %v643 = vsub.f32 %v639, %v641
        %v644 = vadd.f32 %v478, %v642
        %v645 = vadd.f32 %v479, %v643
        %v646 = vadd.f32 %v480, %v484
        %v647 = vadd.f32 %v481, %v485
        %v648 = vadd.f32 %v482, %v486
        %s649 = scalar_lea.vmem %s152, 72
        %v650 = vld [vmem:[%s649] sm:$0xff]
        %v651 = vld [vmem:[%s649 + $0x8] sm:$0xff]
        %v652 = vld [vmem:[%s649 + $0x10] sm:$0xf]
        %v653 = vmul.f32 %v650, %v650
        %v654 = vmul.f32 %v651, %v651
        %v655 = vmul.f32 %v652, %v652
        %v659 = vrot.slane %v650, 1
        %v660 = vrot.slane %v651, 1
        %v661 = vsel %vm162, %v659, %v660
        %v662 = vrot.slane %v652, 1
        %v663 = vsel %vm162, %v660, %v662
        %v666 = vadd.f32 %v650, %v661
        %v667 = vadd.f32 %v651, %v663
        %v671 = vrot.slane %v653, 1
        %v672 = vrot.slane %v654, 1
        %v673 = vsel %vm162, %v671, %v672
        %v674 = vrot.slane %v655, 1
        %v675 = vsel %vm162, %v672, %v674
        %v678 = vadd.f32 %v653, %v673
        %v679 = vadd.f32 %v654, %v675
        %v680 = vrot.slane %v650, 2
        %v681 = vrot.slane %v651, 2
        %v682 = vsel %vm184, %v680, %v681
        %v683 = vrot.slane %v652, 2
        %v684 = vsel %vm184, %v681, %v683
        %v687 = vadd.f32 %v666, %v682
        %v688 = vadd.f32 %v667, %v684
        %v689 = vrot.slane %v653, 2
        %v690 = vrot.slane %v654, 2
        %v691 = vsel %vm184, %v689, %v690
        %v692 = vrot.slane %v655, 2
        %v693 = vsel %vm184, %v690, %v692
        %v696 = vadd.f32 %v678, %v691
        %v697 = vadd.f32 %v679, %v693
        %v698 = vrot.slane %v650, 3
        %v699 = vrot.slane %v651, 3
        %v700 = vsel %vm203, %v698, %v699
        %v701 = vrot.slane %v652, 3
        %v702 = vsel %vm203, %v699, %v701
        %v705 = vadd.f32 %v687, %v700
        %v706 = vadd.f32 %v688, %v702
        %v707 = vrot.slane %v653, 3
        %v708 = vrot.slane %v654, 3
        %v709 = vsel %vm203, %v707, %v708
        %v710 = vrot.slane %v655, 3
        %v711 = vsel %vm203, %v708, %v710
        %v714 = vadd.f32 %v696, %v709
        %v715 = vadd.f32 %v697, %v711
        %v716 = vrot.slane %v650, 4
        %v717 = vrot.slane %v651, 4
        %v718 = vsel %vm222, %v716, %v717
        %v719 = vrot.slane %v652, 4
        %v720 = vsel %vm222, %v717, %v719
        %v723 = vadd.f32 %v705, %v718
        %v724 = vadd.f32 %v706, %v720
        %v725 = vrot.slane %v653, 4
        %v726 = vrot.slane %v654, 4
        %v727 = vsel %vm222, %v725, %v726
        %v728 = vrot.slane %v655, 4
        %v729 = vsel %vm222, %v726, %v728
        %v732 = vadd.f32 %v714, %v727
        %v733 = vadd.f32 %v715, %v729
        %736 = vrot.lane.b32.xlu0 %v723, 127
        %v737 = vpop.permute.xlu0 %736
        %738 = vrot.lane.b32.xlu0 %v724, 127
        %v739 = vpop.permute.xlu0 %738
        %v742 = vadd.f32 %v723, %v737
        %v743 = vadd.f32 %v724, %v739
        %746 = vrot.lane.b32.xlu0 %v732, 127
        %v747 = vpop.permute.xlu0 %746
        %748 = vrot.lane.b32.xlu0 %v733, 127
        %v749 = vpop.permute.xlu0 %748
        %v752 = vadd.f32 %v732, %v747
        %v753 = vadd.f32 %v733, %v749
        %754 = vrot.lane.b32.xlu0 %v723, 126
        %v755 = vpop.permute.xlu0 %754
        %756 = vrot.lane.b32.xlu0 %v724, 126
        %v757 = vpop.permute.xlu0 %756
        %v760 = vadd.f32 %v742, %v755
        %v761 = vadd.f32 %v743, %v757
        %762 = vrot.lane.b32.xlu0 %v732, 126
        %v763 = vpop.permute.xlu0 %762
        %764 = vrot.lane.b32.xlu0 %v733, 126
        %v765 = vpop.permute.xlu0 %764
        %v768 = vadd.f32 %v752, %v763
        %v769 = vadd.f32 %v753, %v765
        %770 = vrot.lane.b32.xlu0 %v723, 125
        %v771 = vpop.permute.xlu0 %770
        %772 = vrot.lane.b32.xlu0 %v724, 125
        %v773 = vpop.permute.xlu0 %772
        %v776 = vadd.f32 %v760, %v771
        %v777 = vadd.f32 %v761, %v773
        %778 = vrot.lane.b32.xlu0 %v732, 125
        %v779 = vpop.permute.xlu0 %778
        %780 = vrot.lane.b32.xlu0 %v733, 125
        %v781 = vpop.permute.xlu0 %780
        %v784 = vadd.f32 %v768, %v779
        %v785 = vadd.f32 %v769, %v781
        %786 = vrot.lane.b32.xlu0 %v723, 124
        %v787 = vpop.permute.xlu0 %786
        %788 = vrot.lane.b32.xlu0 %v724, 124
        %v789 = vpop.permute.xlu0 %788
        %v792 = vadd.f32 %v776, %v787
        %v793 = vadd.f32 %v777, %v789
        %794 = vrot.lane.b32.xlu0 %v732, 124
        %v795 = vpop.permute.xlu0 %794
        %796 = vrot.lane.b32.xlu0 %v733, 124
        %v797 = vpop.permute.xlu0 %796
        %v800 = vadd.f32 %v784, %v795
        %v801 = vadd.f32 %v785, %v797
        %v802 = vmul.f32 %v792, 0.04
        %v803 = vmul.f32 %v793, 0.04
        %v804 = vmul.f32 %v800, 0.04
        %v805 = vmul.f32 %v801, 0.04
        %v806 = vmul.f32 %v802, %v802
        %v807 = vmul.f32 %v803, %v803
        %v808 = vsub.f32 %v804, %v806
        %v809 = vsub.f32 %v805, %v807
        %v810 = vadd.f32 %v644, %v808
        %v811 = vadd.f32 %v645, %v809
        %v812 = vadd.f32 %v646, %v650
        %v813 = vadd.f32 %v647, %v651
        %v814 = vadd.f32 %v648, %v652
        %v815 = vmul.f32 %v810, 0.25
        %v816 = vmul.f32 %v811, 0.25
        %vm817 = vcmask 130048
        %818 = vst.msk [vmem:[%s140] sm:$0xff] %vm817, %v815
        %819 = vst.msk [vmem:[%s140 + $0x8] sm:$0xff] %vm817, %v816
        %v820 = vmul.f32 %v812, 0.25
        %v821 = vmul.f32 %v813, 0.25
        %v822 = vmul.f32 %v814, 0.25
        %826 = vrot.lane.b32.xlu0 %v820, 126
        %v827 = vpop.permute.xlu0 %826
        %828 = vrot.lane.b32.xlu0 %v821, 126
        %v829 = vpop.permute.xlu0 %828
        %830 = vrot.lane.b32.xlu0 %v822, 126
        %v831 = vpop.permute.xlu0 %830
        %vm835 = vcmask 130050
        %836 = vst.msk [vmem:[%s147 - $0x2] sm:$0xfc] %vm835, %v827
        %837 = vst.msk [vmem:[%s147 + $0x6] sm:$0xff] %vm817, %v829
        %vm838 = vcmask 123904
        %839 = vst.msk [vmem:[%s147 + $0xe] sm:$0x3] %vm838, %v831
        %s840 = sand.u32 %s54, 1
        %s841 = scalar_lea.sflag [#allocation3], %s840
        %s842 = sand.u32 %s54, 1
        %s843 = smul.addr %s842, 16
        %s844 = scalar_lea.vmem [#allocation2], %s843
        %s845 = sand.u32 %s80, 1
        %s846 = scalar_lea.sflag [#allocation5], %s845
        %s847 = sand.u32 %s80, 1
        %s848 = smul.addr %s847, 16
        %s849 = scalar_lea.vmem [#allocation4], %s848
        // Predicated region
        $region25: #{tpu_custom_call.1} parent=23 // pred_check
          %p850 = pneg %p64
        $region26: #{tpu_custom_call.1} parent=23 // pred_check_branch
          %852 = sbr.rel (%p850) target = $region28
        $region27: #{tpu_custom_call.1} parent=23 // pred_region
          %s854 = ssub.s32 256, 256
          %855 = vsyncadd %s841, %s854
          %s856 = smul.addr %s20, 2
          %s857 = smul.addr %s856, 128
          %s858 = scalar_lea.hbm %s1, %s857
          %s859 = sshll.u32 %s844, 4
          %s860 = int_to_ptr.vmem [resolvable:$true] %s859
          %865 = dma.vmem_to_hbm [thread:$0]  %s860, 256, %s858, %s841, 128, 128, 8
        $region28: #{tpu_custom_call.1} parent=23 // pred_fallthru
          _
        // Predicated region
        $region29: #{tpu_custom_call.1} parent=23 // pred_check
          %p866 = pneg %p90
        $region30: #{tpu_custom_call.1} parent=23 // pred_check_branch
          %868 = sbr.rel (%p866) target = $region32
        $region31: #{tpu_custom_call.1} parent=23 // pred_region
          %s870 = ssub.s32 256, 256
          %871 = vsyncadd %s846, %s870
          %s872 = smul.addr %s20, 2
          %s873 = smul.addr %s872, 128
          %s874 = scalar_lea.hbm %s2, %s873
          %s875 = sshll.u32 %s849, 4
          %s876 = int_to_ptr.vmem [resolvable:$true] %s875
          %881 = dma.vmem_to_hbm [thread:$0]  %s876, 256, %s874, %s846, 128, 128, 8
        $region32: #{tpu_custom_call.1} parent=23 // pred_fallthru
          _
      $region24: #{tpu_custom_call.1} parent=5 // pred_fallthru
        _
      %p882 = scmp.le.s32.totalorder 2, %s15
      // Predicated region
      $region33: #{tpu_custom_call.1} parent=5 // pred_check
        %p883 = pneg %p882
      $region34: #{tpu_custom_call.1} parent=5 // pred_check_branch
        %885 = sbr.rel (%p883) target = $region36
      $region35: #{tpu_custom_call.1} parent=5 // pred_region
        %s886 = ssub.s32 %s15, 2
        // Predicated region
        $region37: #{tpu_custom_call.1} parent=35 // pred_check
          %p887 = pneg %p70
        $region38: #{tpu_custom_call.1} parent=35 // pred_check_branch
          %889 = sbr.rel (%p887) target = $region40
        $region39: #{tpu_custom_call.1} parent=35 // pred_region
          %s890 = sand.u32 %s55, 1
          %s891 = scalar_lea.sflag [#allocation3], %s890
          %s892 = sand.u32 %s55, 1
          %s893 = smul.addr %s892, 16
          %s894 = scalar_lea.vmem [#allocation2], %s893
          %895 = dma.done %s891, 256
        $region40: #{tpu_custom_call.1} parent=35 // pred_fallthru
          _
        // Predicated region
        $region41: #{tpu_custom_call.1} parent=35 // pred_check
          %p896 = pneg %p96
        $region42: #{tpu_custom_call.1} parent=35 // pred_check_branch
          %898 = sbr.rel (%p896) target = $region44
        $region43: #{tpu_custom_call.1} parent=35 // pred_region
          %s899 = sand.u32 %s81, 1
          %s900 = scalar_lea.sflag [#allocation5], %s899
          %s901 = sand.u32 %s81, 1
          %s902 = smul.addr %s901, 16
          %s903 = scalar_lea.vmem [#allocation4], %s902
          %904 = dma.done %s900, 256
        $region44: #{tpu_custom_call.1} parent=35 // pred_fallthru
          _
      $region36: #{tpu_custom_call.1} parent=5 // pred_fallthru
        _
    $region6: #{tpu_custom_call.1} parent=1 // loop_footer
      %s19 = sadd.s32 1, %s15
    $region7: #{tpu_custom_call.1} parent=1 // loop_footer_branch
      %14 = sbr.rel target = $region3
    $region8: #{tpu_custom_call.1} parent=1 // loop_exit
      _
    %905 = vsyncpa [#allocation3], 1
    %s906 = scalar_lea.sflag [#allocation3], 1
    %907 = vsyncpa %s906, 1
    %908 = vsyncpa [#allocation5], 1
    %s909 = scalar_lea.sflag [#allocation5], 1
    %910 = vsyncpa %s909, 1

</llo_original>
